<compile_context>
chip_gen: v6e
topology: v6e:2x2x1
jax: 0.10.0
libtpu: 0.0.40
codegen_flags: <defaults>
</compile_context>

<pallas_src>
import functools
import math

import jax
import jax.numpy as jnp
from jax.experimental import pallas as pl
from jax.experimental.pallas import tpu as pltpu


def _round_up(n, m):
    return ((n + m - 1) // m) * m


def _attention_head_kernel(xq_ref, xk_ref, wq_ref, wkv_ref, o_ref,
                           q_scratch, acc_ref, *, inv_sqrt_d):
    ki = pl.program_id(1)
    b, tq, f = xq_ref.shape
    tk = xk_ref.shape[1]
    dp = wq_ref.shape[1]
    cdt = xq_ref.dtype  # MXU compute dtype (f32 in -> f32 path, bf16 in -> fast bf16 path)

    @pl.when(ki == 0)
    def _init():
        # Query projection once per q-tile: one MXU pass with M = B*tq, f32 accumulate.
        xq = xq_ref[...].reshape(b * tq, f)
        q_scratch[...] = jnp.dot(
            xq, wq_ref[...], preferred_element_type=jnp.float32
        ).reshape(b, tq, dp)
        acc_ref[...] = jnp.zeros_like(acc_ref)

    # Fused key|value projection for this k-tile: one MXU pass, M = B*tk, N = 2*Dp.
    xk = xk_ref[...].reshape(b * tk, f)
    kv = jnp.dot(xk, wkv_ref[...], preferred_element_type=jnp.float32).reshape(b, tk, 2 * dp)
    keys = kv[:, :, :dp]     # 128-aligned split, no relayout
    value = kv[:, :, dp:]

    # scores = bmm(query, keys^T) / sqrt(out_features)  -> (B, tq, tk), f32 accumulate.
    # einsum contracts the last dims directly (no per-batch XLU transpose of keys).
    scores = jnp.einsum(
        "bqd,bkd->bqk",
        q_scratch[...].astype(cdt),
        keys.astype(cdt),
        preferred_element_type=jnp.float32,
    ) * inv_sqrt_d

    # softmax over dim 0 (the batch dim), exactly as in the PyTorch module.  B is whole in
    # every block, so this is exact per (q-tile, k-tile) block with no cross-tile state.
    m = jnp.max(scores, axis=0, keepdims=True)
    e = jnp.exp(scores - m)
    denom = jnp.sum(e, axis=0, keepdims=True)     # (1, tq, tk), always >= 1
    attn = e * (1.0 / denom)                      # exact f32 reciprocal of the small denom

    # out += bmm(attn, value), accumulated over k-tiles in f32.
    acc_ref[...] += jnp.einsum(
        "bqk,bkd->bqd",
        attn.astype(cdt),
        value.astype(cdt),
        preferred_element_type=jnp.float32,
    )

    @pl.when(ki == pl.num_programs(1) - 1)
    def _finalize():
        o_ref[...] = acc_ref[...].astype(o_ref.dtype)


def attention_head(x, w_key, w_query, w_value, *, block_s: int = 256):
    """AttentionHead forward.

    x: (B, S, F).  w_*: PyTorch nn.Linear weights of shape (D, F) = (out, in), bias-free.
    Returns (B, S, D) in x.dtype.  Only the S (q/k) axes are tiled; B is never split because
    the dim-0 softmax couples all batch elements.
    """
    B, S, F = x.shape
    D = w_key.shape[0]
    dtype = x.dtype
    itemsize = jnp.dtype(dtype).itemsize

    # Lane-dense output / head dim (multiple of 128 -> unmasked vst stores).
    Dp = _round_up(D, 128)
    # One tile size for both the q and k axes of S (multiple of 8 sublanes).
    t = _round_up(min(block_s, _round_up(S, 8)), 8)
    S_pad = _round_up(S, t)
    nq = S_pad // t
    nk = S_pad // t

    # Zero padding is exact for this module (see file header).
    x_p = x if S_pad == S else jnp.pad(x, ((0, 0), (0, S_pad - S), (0, 0)))

    def _prep(w):  # (D, F) -> (F, Dp), zero-padded, cast to the kernel compute dtype
        w_t = w.T.astype(dtype)
        if Dp != D:
            w_t = jnp.pad(w_t, ((0, 0), (0, Dp - D)))
        return w_t

    wq_p = _prep(w_query)                                            # (F, Dp)
    wkv_p = jnp.concatenate([_prep(w_key), _prep(w_value)], axis=1)  # (F, 2*Dp)

    inv_sqrt_d = 1.0 / math.sqrt(float(D))                           # scale uses the ORIGINAL D
    kernel = functools.partial(_attention_head_kernel, inv_sqrt_d=inv_sqrt_d)

    # Rough VMEM budget: double-buffered x/weight/output blocks + scratch + in-kernel temps.
    vmem_est = (
        2 * 2 * B * t * F * itemsize          # xq, xk blocks (double buffered)
        + 2 * 3 * F * Dp * itemsize           # Wq + [Wk|Wv] blocks
        + 2 * B * t * Dp * itemsize           # output block
        + 2 * B * t * Dp * 4                  # q_scratch + accumulator
        + 3 * B * t * t * 4                   # scores / exp / attn temporaries
        + B * t * 2 * Dp * 4                  # fused kv temporary
    )
    vmem_limit = int(min(max(2 * vmem_est, 32 * 1024 * 1024), 48 * 1024 * 1024))

    flops = int(
        2 * B * S_pad * F * Dp                # query projection
        + 2 * B * S_pad * F * 2 * Dp * nq     # key/value projection (recomputed per q-tile)
        + 2 * 2 * B * S_pad * S_pad * Dp      # score bmm + output bmm
    )
    transcendentals = int(B * S_pad * S_pad)  # exp
    bytes_accessed = int(
        (nq + 1) * B * S_pad * F * itemsize   # x read once as q tiles, per-q-tile as k tiles
        + 3 * F * Dp * itemsize               # weights (resident in VMEM)
        + B * S_pad * Dp * itemsize           # output
    )

    out_p = pl.pallas_call(
        kernel,
        out_shape=jax.ShapeDtypeStruct((B, S_pad, Dp), dtype),
        grid=(nq, nk),
        in_specs=[
            pl.BlockSpec((B, t, F), lambda qi, ki: (0, qi, 0)),    # x -> q tile
            pl.BlockSpec((B, t, F), lambda qi, ki: (0, ki, 0)),    # x -> k tile
            pl.BlockSpec((F, Dp), lambda qi, ki: (0, 0)),          # Wq (resident)
            pl.BlockSpec((F, 2 * Dp), lambda qi, ki: (0, 0)),      # [Wk | Wv] (resident)
        ],
        out_specs=pl.BlockSpec((B, t, Dp), lambda qi, ki: (0, qi, 0)),
        scratch_shapes=[
            pltpu.VMEM((B, t, Dp), jnp.float32),   # query scratch (per q-tile)
            pltpu.VMEM((B, t, Dp), jnp.float32),   # f32 output accumulator
        ],
        compiler_params=pltpu.CompilerParams(
            dimension_semantics=("parallel", "arbitrary"),
            vmem_limit_bytes=vmem_limit,
        ),
        cost_estimate=pl.CostEstimate(
            flops=flops,
            transcendentals=transcendentals,
            bytes_accessed=bytes_accessed,
        ),
    )(x_p, x_p, wq_p, wkv_p)

    return out_p[:, :S, :D]


def attention_head_ref(x, w_key, w_query, w_value):
    """Pure-JAX reference mirroring the PyTorch forward (full f32 matmul precision)."""
    hi = jax.lax.Precision.HIGHEST
    keys = jnp.matmul(x, w_key.T, precision=hi)
    query = jnp.matmul(x, w_query.T, precision=hi)
    value = jnp.matmul(x, w_value.T, precision=hi)
    d = jnp.float32(w_key.shape[0])
    scores = jnp.einsum("bqd,bkd->bqk", query, keys, precision=hi) / jnp.sqrt(d)
    attn = jax.nn.softmax(scores, axis=0)   # dim=0 (batch) softmax, as in the module
    return jnp.einsum("bqk,bkd->bqd", attn, value, precision=hi)


def _check(name, out, ref):
    # Tolerance covers default (bf16-pass) f32 matmul precision on TPU, which applies to the
    # kernel body when it is executed through the interpreter; any semantic bug (wrong softmax
    # axis, missing 1/sqrt(d), transposed weights, ...) produces O(max|ref|) errors and fails.
    err = float(jnp.max(jnp.abs(out.astype(jnp.float32) - ref.astype(jnp.float32))))
    scale = float(jnp.max(jnp.abs(ref)))
    tol = 3e-2 * max(scale, 1.0)
    assert err <= tol, f"{name}: max |out - ref| = {err:.3e} exceeds tol {tol:.3e}"


if __name__ == "__main__":
    key = jax.random.PRNGKey(0)
    keys8 = jax.random.split(key, 8)

    # Case 1: the module's toy shapes (single-tile grid, D padded to 128 lanes).
    B, S, F_IN, D_OUT = 2, 8, 32, 16
    x = jax.random.normal(keys8[0], (B, S, F_IN), dtype=jnp.float32)
    # nn.Linear(in_features, out_features, bias=False).weight has shape (out, in)
    w_key = jax.random.normal(keys8[1], (D_OUT, F_IN), dtype=jnp.float32) * 0.1
    w_query = jax.random.normal(keys8[2], (D_OUT, F_IN), dtype=jnp.float32) * 0.1
    w_value = jax.random.normal(keys8[3], (D_OUT, F_IN), dtype=jnp.float32) * 0.1

    out = jax.block_until_ready(attention_head(x, w_key, w_query, w_value))
    ref = attention_head_ref(x, w_key, w_query, w_value)
    assert out.shape == (B, S, D_OUT)
    _check("case 1", out, ref)

    # Case 2: multi-tile grid with S padding (exercises q=parallel / k=arbitrary accumulation).
    B2, S2, F2, D2 = 2, 80, 32, 24
    x2 = jax.random.normal(keys8[4], (B2, S2, F2), dtype=jnp.float32)
    wk2 = jax.random.normal(keys8[5], (D2, F2), dtype=jnp.float32) * 0.1
    wq2 = jax.random.normal(keys8[6], (D2, F2), dtype=jnp.float32) * 0.1
    wv2 = jax.random.normal(keys8[7], (D2, F2), dtype=jnp.float32) * 0.1

    out2 = jax.block_until_ready(attention_head(x2, wk2, wq2, wv2, block_s=32))
    ref2 = attention_head_ref(x2, wk2, wq2, wv2)
    assert out2.shape == (B2, S2, D2)
    _check("case 2", out2, ref2)

    print("KERNEL_OK")
</pallas_src>

<mosaic_0001>
module attributes {stable_mosaic.version = 11 : i64} {
  func.func @_attention_head_kernel(%arg0: i32, %arg1: i32, %arg2: memref<2x8x32xf32, #tpu.memory_space<vmem>>, %arg3: memref<2x8x32xf32, #tpu.memory_space<vmem>>, %arg4: memref<32x128xf32, #tpu.memory_space<vmem>>, %arg5: memref<32x256xf32, #tpu.memory_space<vmem>>, %arg6: memref<2x8x128xf32, #tpu.memory_space<vmem>>, %arg7: memref<2x8x128xf32, #tpu.memory_space<vmem>>, %arg8: memref<2x8x128xf32, #tpu.memory_space<vmem>>) attributes {dimension_semantics = [#tpu.dimension_semantics<parallel>, #tpu.dimension_semantics<arbitrary>], iteration_bounds = array<i64: 1, 1>, scalar_prefetch = 0 : i64, scratch_operands = 2 : i64, tpu.core_type = #tpu.core_type<tc>, window_params = [{transform_indices = @transform_0, window_bounds = array<i64: 2, 8, 32>}, {transform_indices = @transform_1, window_bounds = array<i64: 2, 8, 32>}, {pipeline_mode = #tpu.pipeline_mode<synchronous>, transform_indices = @transform_2, window_bounds = array<i64: 32, 128>}, {pipeline_mode = #tpu.pipeline_mode<synchronous>, transform_indices = @transform_3, window_bounds = array<i64: 32, 256>}, {transform_indices = @transform_4, window_bounds = array<i64: 2, 8, 128>}]} {
    %c0_i32 = arith.constant 0 : i32
    %0 = arith.cmpi eq, %arg1, %c0_i32 : i32
    %1 = arith.extui %0 : i1 to i32
    %c0_i32_0 = arith.constant 0 : i32
    %2 = arith.cmpi ne, %1, %c0_i32_0 : i32
    scf.if %2 {
      %c0_22 = arith.constant 0 : index
      %c0_23 = arith.constant 0 : index
      %c0_24 = arith.constant 0 : index
      %32 = vector.load %arg2[%c0_22, %c0_23, %c0_24] : memref<2x8x32xf32, #tpu.memory_space<vmem>>, vector<2x8x32xf32>
      %33 = vector.shape_cast %32 : vector<2x8x32xf32> to vector<16x32xf32>
      %c0_25 = arith.constant 0 : index
      %c0_26 = arith.constant 0 : index
      %34 = vector.load %arg4[%c0_25, %c0_26] : memref<32x128xf32, #tpu.memory_space<vmem>>, vector<32x128xf32>
      %cst_27 = arith.constant dense<0.000000e+00> : vector<16x128xf32>
      %35 = tpu.matmul %33, %34, %cst_27 {dimension_numbers = #tpu.dot_dimension_numbers<[1], [0], [0], [1], [0, 0, 1, 1], [], []>} : vector<16x32xf32>, vector<32x128xf32>, vector<16x128xf32> -> vector<16x128xf32>
      %36 = vector.shape_cast %35 : vector<16x128xf32> to vector<2x8x128xf32>
      %c0_28 = arith.constant 0 : index
      %c0_29 = arith.constant 0 : index
      %c0_30 = arith.constant 0 : index
      %37 = vector.load %arg7[%c0_28, %c0_29, %c0_30] : memref<2x8x128xf32, #tpu.memory_space<vmem>>, vector<2x8x128xf32>
      tpu.vector_store %arg7[%c0_28, %c0_29, %c0_30], %36 {strides = array<i32>} : memref<2x8x128xf32, #tpu.memory_space<vmem>>, vector<2x8x128xf32>,
      %cst_31 = arith.constant 0.000000e+00 : f32
      %38 = vector.broadcast %cst_31 : f32 to vector<2x8x128xf32>
      %c0_32 = arith.constant 0 : index
      %c0_33 = arith.constant 0 : index
      %c0_34 = arith.constant 0 : index
      %39 = vector.load %arg8[%c0_32, %c0_33, %c0_34] : memref<2x8x128xf32, #tpu.memory_space<vmem>>, vector<2x8x128xf32>
      tpu.vector_store %arg8[%c0_32, %c0_33, %c0_34], %38 {strides = array<i32>} : memref<2x8x128xf32, #tpu.memory_space<vmem>>, vector<2x8x128xf32>,
    } else {
    }
    %c0 = arith.constant 0 : index
    %c0_1 = arith.constant 0 : index
    %c0_2 = arith.constant 0 : index
    %3 = vector.load %arg3[%c0, %c0_1, %c0_2] : memref<2x8x32xf32, #tpu.memory_space<vmem>>, vector<2x8x32xf32>
    %4 = vector.shape_cast %3 : vector<2x8x32xf32> to vector<16x32xf32>
    %c0_3 = arith.constant 0 : index
    %c0_4 = arith.constant 0 : index
    %5 = vector.load %arg5[%c0_3, %c0_4] : memref<32x256xf32, #tpu.memory_space<vmem>>, vector<32x256xf32>
    %cst = arith.constant dense<0.000000e+00> : vector<16x256xf32>
    %6 = tpu.matmul %4, %5, %cst {dimension_numbers = #tpu.dot_dimension_numbers<[1], [0], [0], [1], [0, 0, 1, 1], [], []>} : vector<16x32xf32>, vector<32x256xf32>, vector<16x256xf32> -> vector<16x256xf32>
    %7 = vector.shape_cast %6 : vector<16x256xf32> to vector<2x8x256xf32>
    %8 = vector.extract_strided_slice %7 {offsets = [0, 0, 0], sizes = [2, 8, 128], strides = [1, 1, 1]} : vector<2x8x256xf32> to vector<2x8x128xf32>
    %9 = vector.extract_strided_slice %7 {offsets = [0, 0, 128], sizes = [2, 8, 128], strides = [1, 1, 1]} : vector<2x8x256xf32> to vector<2x8x128xf32>
    %c0_5 = arith.constant 0 : index
    %c0_6 = arith.constant 0 : index
    %c0_7 = arith.constant 0 : index
    %10 = vector.load %arg7[%c0_5, %c0_6, %c0_7] : memref<2x8x128xf32, #tpu.memory_space<vmem>>, vector<2x8x128xf32>
    "tpu.trace_start"() <{level = 10 : i32, message = "bqd,bkd->bqk"}> : () -> ()
    %cst_8 = arith.constant dense<0.000000e+00> : vector<2x8x8xf32>
    %11 = tpu.matmul %10, %8, %cst_8 {dimension_numbers = #tpu.dot_dimension_numbers<[2], [2], [1], [1], [0, 0, 0, 1, 1, 1], [0], [0]>} : vector<2x8x128xf32>, vector<2x8x128xf32>, vector<2x8x8xf32> -> vector<2x8x8xf32>
    "tpu.trace_stop"() : () -> ()
    %cst_9 = arith.constant 2.500000e-01 : f32
    %12 = vector.broadcast %cst_9 : f32 to vector<2x8x8xf32>
    %13 = arith.mulf %11, %12 : vector<2x8x8xf32>
    %cst_10 = arith.constant dense<0xFF800000> : vector<8x8xf32>
    %14 = vector.multi_reduction <maximumf>, %13, %cst_10 [0] : vector<2x8x8xf32> to vector<8x8xf32>
    %15 = vector.shape_cast %14 : vector<8x8xf32> to vector<1x8x8xf32>
    %16 = vector.broadcast %15 : vector<1x8x8xf32> to vector<2x8x8xf32>
    %17 = arith.subf %13, %16 : vector<2x8x8xf32>
    %18 = math.exp %17 : vector<2x8x8xf32>
    %cst_11 = arith.constant dense<0.000000e+00> : vector<8x8xf32>
    %19 = vector.multi_reduction <add>, %18, %cst_11 [0] : vector<2x8x8xf32> to vector<8x8xf32>
    %20 = vector.shape_cast %19 : vector<8x8xf32> to vector<1x8x8xf32>
    %cst_12 = arith.constant 1.000000e+00 : f32
    %21 = vector.broadcast %cst_12 : f32 to vector<1x8x8xf32>
    %22 = arith.divf %21, %20 : vector<1x8x8xf32>
    %23 = vector.broadcast %22 : vector<1x8x8xf32> to vector<2x8x8xf32>
    %24 = arith.mulf %18, %23 : vector<2x8x8xf32>
    %c0_13 = arith.constant 0 : index
    %c0_14 = arith.constant 0 : index
    %c0_15 = arith.constant 0 : index
    %25 = vector.load %arg8[%c0_13, %c0_14, %c0_15] : memref<2x8x128xf32, #tpu.memory_space<vmem>>, vector<2x8x128xf32>
    "tpu.trace_start"() <{level = 10 : i32, message = "bqk,bkd->bqd"}> : () -> ()
    %cst_16 = arith.constant dense<0.000000e+00> : vector<2x8x128xf32>
    %26 = tpu.matmul %24, %9, %cst_16 {dimension_numbers = #tpu.dot_dimension_numbers<[2], [1], [1], [2], [0, 0, 0, 1, 1, 2], [0], [0]>} : vector<2x8x8xf32>, vector<2x8x128xf32>, vector<2x8x128xf32> -> vector<2x8x128xf32>
    "tpu.trace_stop"() : () -> ()
    %27 = arith.addf %25, %26 : vector<2x8x128xf32>
    %c0_17 = arith.constant 0 : index
    %c0_18 = arith.constant 0 : index
    %c0_19 = arith.constant 0 : index
    %28 = vector.load %arg8[%c0_17, %c0_18, %c0_19] : memref<2x8x128xf32, #tpu.memory_space<vmem>>, vector<2x8x128xf32>
    tpu.vector_store %arg8[%c0_17, %c0_18, %c0_19], %27 {strides = array<i32>} : memref<2x8x128xf32, #tpu.memory_space<vmem>>, vector<2x8x128xf32>,
    %c0_i32_20 = arith.constant 0 : i32
    %29 = arith.cmpi eq, %arg1, %c0_i32_20 : i32
    %30 = arith.extui %29 : i1 to i32
    %c0_i32_21 = arith.constant 0 : i32
    %31 = arith.cmpi ne, %30, %c0_i32_21 : i32
    scf.if %31 {
      %c0_22 = arith.constant 0 : index
      %c0_23 = arith.constant 0 : index
      %c0_24 = arith.constant 0 : index
      %32 = vector.load %arg8[%c0_22, %c0_23, %c0_24] : memref<2x8x128xf32, #tpu.memory_space<vmem>>, vector<2x8x128xf32>
      %c0_25 = arith.constant 0 : index
      %c0_26 = arith.constant 0 : index
      %c0_27 = arith.constant 0 : index
      %33 = vector.load %arg6[%c0_25, %c0_26, %c0_27] : memref<2x8x128xf32, #tpu.memory_space<vmem>>, vector<2x8x128xf32>
      tpu.vector_store %arg6[%c0_25, %c0_26, %c0_27], %32 {strides = array<i32>} : memref<2x8x128xf32, #tpu.memory_space<vmem>>, vector<2x8x128xf32>,
    } else {
    }
    return
  }
  func.func @transform_0(%arg0: i32, %arg1: i32) -> (i32, i32, i32) {
    %c0_i32 = arith.constant 0 : i32
    %c0_i32_0 = arith.constant 0 : i32
    %c0_i32_1 = arith.constant 0 : i32
    return %c0_i32, %arg0, %c0_i32_0 : i32, i32, i32
  }
  func.func @transform_1(%arg0: i32, %arg1: i32) -> (i32, i32, i32) {
    %c0_i32 = arith.constant 0 : i32
    %c0_i32_0 = arith.constant 0 : i32
    %c0_i32_1 = arith.constant 0 : i32
    return %c0_i32, %arg1, %c0_i32_0 : i32, i32, i32
  }
  func.func @transform_2(%arg0: i32, %arg1: i32) -> (i32, i32) {
    %c0_i32 = arith.constant 0 : i32
    %c0_i32_0 = arith.constant 0 : i32
    %c0_i32_1 = arith.constant 0 : i32
    return %c0_i32, %c0_i32_0 : i32, i32
  }
  func.func @transform_3(%arg0: i32, %arg1: i32) -> (i32, i32) {
    %c0_i32 = arith.constant 0 : i32
    %c0_i32_0 = arith.constant 0 : i32
    %c0_i32_1 = arith.constant 0 : i32
    return %c0_i32, %c0_i32_0 : i32, i32
  }
  func.func @transform_4(%arg0: i32, %arg1: i32) -> (i32, i32, i32) {
    %c0_i32 = arith.constant 0 : i32
    %c0_i32_0 = arith.constant 0 : i32
    %c0_i32_1 = arith.constant 0 : i32
    return %c0_i32, %arg0, %c0_i32_0 : i32, i32, i32
  }
}

</mosaic_0001>

<llo_original>
// kernel: tpu_custom_call.1
$region0: #{tpu_custom_call.1}
  #allocation0 [shape = 'u32[]', space=smem, size = 0x4, offset = 0x4, fixed_abs, tag = 'smem constant byte address 0x4 - core index']
  #allocation1 [shape = 'u32[144,128]{1,0:T(1,128)}', space=vmem, size = 0x12000, scoped, tag = 'internal scratch']
  #allocation2 [shape = 'f32[2,8,128]{2,1,0:T(8,128)}', space=vmem, size = 0x2000, scoped, tag = 'scratch operand']
  #allocation3 [shape = 'f32[2,8,128]{2,1,0:T(8,128)}', space=vmem, size = 0x2000, scoped, tag = 'scratch operand']
  %s0 = inlined_call_operand.hbm [shape: f32[2,8,32], index: 0, kind: input, shape index: {}]
  %s1 = inlined_call_operand.hbm [shape: f32[2,8,32], index: 1, kind: input, shape index: {}]
  %s2 = inlined_call_operand.hbm [shape: f32[32,128], index: 2, kind: input, shape index: {}]
  %s3 = inlined_call_operand.hbm [shape: f32[32,256], index: 3, kind: input, shape index: {}]
  %s4 = inlined_call_operand.hbm [shape: f32[2,8,128], index: 4, kind: output, shape index: {}]
  %s5 = sld [smem:[#allocation0]]
  $region50: #{tpu_custom_call.1} parent=0
    _
  %s7 = ssub.s32 1, %s5
  %s8 = scalar_select 0, %s7, %s5
  $region1: #{tpu_custom_call.1} parent=0
    #allocation4 [shape = 'u8[8192]{0}', space=vmem, size = 0x2000, scoped, tag = 'input window, operand 0, single buffered']
    #allocation5 [shape = 's32[1]{0}', space=sflag, size = 0x4, scoped, tag = 'scoped memory for tpu_custom_call.1']
    #allocation6 [shape = 's32[1]{0}', space=sflag, size = 0x4, scoped, tag = 'scoped memory for tpu_custom_call.1']
    #allocation7 [shape = 'u8[8192]{0}', space=vmem, size = 0x2000, scoped, tag = 'input window, operand 1, single buffered']
    #allocation8 [shape = 's32[1]{0}', space=sflag, size = 0x4, scoped, tag = 'scoped memory for tpu_custom_call.1']
    #allocation9 [shape = 'u8[16384]{0}', space=vmem, size = 0x4000, scoped, tag = 'input window, operand 2, single buffered']
    #allocation10 [shape = 'u8[32768]{0}', space=vmem, size = 0x8000, scoped, tag = 'input window, operand 3, single buffered']
    #allocation11 [shape = 's32[1]{0}', space=sflag, size = 0x4, scoped, tag = 'scoped memory for tpu_custom_call.1']
    #allocation12 [shape = 'u8[8192]{0}', space=vmem, size = 0x2000, scoped, tag = 'output window, operand 0, single buffered']
    %9 = vsyncpa [#allocation5], 0
    %10 = vsyncpa [#allocation8], 0
    %11 = vsyncpa [#allocation11], 0
    %12 = vsyncpa [#allocation6], 0
    // Predicated region
    $region2: #{tpu_custom_call.1} parent=1 // pred_check
      _
    $region3: #{tpu_custom_call.1} parent=1 // pred_check_branch
      %14 = sbr.rel (0) target = $region5
    $region4: #{tpu_custom_call.1} parent=1 // pred_region
      %s16 = ssub.s32 256, 256
      %17 = vsyncadd [#allocation5], %s16
      %s18 = sshll.u32 [#allocation4], 4
      %s19 = int_to_ptr.vmem [resolvable:$true] %s18
      %24 = dma.hbm_to_vmem [thread:$0]  %s0, 256, %s19, [#allocation5], 128, 128, 8
    $region5: #{tpu_custom_call.1} parent=1 // pred_fallthru
      _
    // Predicated region
    $region6: #{tpu_custom_call.1} parent=1 // pred_check
      _
    $region7: #{tpu_custom_call.1} parent=1 // pred_check_branch
      %26 = sbr.rel (0) target = $region9
    $region8: #{tpu_custom_call.1} parent=1 // pred_region
      %s28 = ssub.s32 256, 256
      %29 = vsyncadd [#allocation8], %s28
      %s30 = sshll.u32 [#allocation7], 4
      %s31 = int_to_ptr.vmem [resolvable:$true] %s30
      %36 = dma.hbm_to_vmem [thread:$0]  %s1, 256, %s31, [#allocation8], 128, 128, 8
    $region9: #{tpu_custom_call.1} parent=1 // pred_fallthru
      _
    // Predicated region
    $region10: #{tpu_custom_call.1} parent=1 // pred_check
      _
    $region11: #{tpu_custom_call.1} parent=1 // pred_check_branch
      %38 = sbr.rel (0) target = $region13
    $region12: #{tpu_custom_call.1} parent=1 // pred_region
      %s40 = ssub.s32 512, 512
      %41 = vsyncadd [#allocation8], %s40
      %s42 = sshll.u32 [#allocation9], 4
      %s43 = int_to_ptr.vmem [resolvable:$true] %s42
      %48 = dma.hbm_to_vmem [thread:$0]  %s2, 512, %s43, [#allocation8], 128, 128, 8
    $region13: #{tpu_custom_call.1} parent=1 // pred_fallthru
      _
    // Predicated region
    $region14: #{tpu_custom_call.1} parent=1 // pred_check
      _
    $region15: #{tpu_custom_call.1} parent=1 // pred_check_branch
      %50 = sbr.rel (0) target = $region17
    $region16: #{tpu_custom_call.1} parent=1 // pred_region
      %s52 = ssub.s32 1024, 1024
      %53 = vsyncadd [#allocation11], %s52
      %s54 = sshll.u32 [#allocation10], 4
      %s55 = int_to_ptr.vmem [resolvable:$true] %s54
      %60 = dma.hbm_to_vmem [thread:$0]  %s3, 1024, %s55, [#allocation11], 256, 256, 16
    $region17: #{tpu_custom_call.1} parent=1 // pred_fallthru
      _
    // Predicated region
    $region18: #{tpu_custom_call.1} parent=1 // pred_check
      _
    $region19: #{tpu_custom_call.1} parent=1 // pred_check_branch
      %62 = sbr.rel (0) target = $region21
    $region20: #{tpu_custom_call.1} parent=1 // pred_region
      %63 = dma.done [#allocation5], 256
    $region21: #{tpu_custom_call.1} parent=1 // pred_fallthru
      _
    // Predicated region
    $region22: #{tpu_custom_call.1} parent=1 // pred_check
      _
    $region23: #{tpu_custom_call.1} parent=1 // pred_check_branch
      %65 = sbr.rel (0) target = $region25
    $region24: #{tpu_custom_call.1} parent=1 // pred_region
      %66 = dma.done [#allocation8], 256
    $region25: #{tpu_custom_call.1} parent=1 // pred_fallthru
      _
    // Predicated region
    $region26: #{tpu_custom_call.1} parent=1 // pred_check
      _
    $region27: #{tpu_custom_call.1} parent=1 // pred_check_branch
      %68 = sbr.rel (0) target = $region29
    $region28: #{tpu_custom_call.1} parent=1 // pred_region
      %69 = dma.done [#allocation8], 512
    $region29: #{tpu_custom_call.1} parent=1 // pred_fallthru
      _
    // Predicated region
    $region30: #{tpu_custom_call.1} parent=1 // pred_check
      _
    $region31: #{tpu_custom_call.1} parent=1 // pred_check_branch
      %71 = sbr.rel (0) target = $region33
    $region32: #{tpu_custom_call.1} parent=1 // pred_region
      %72 = dma.done [#allocation11], 1024
    $region33: #{tpu_custom_call.1} parent=1 // pred_fallthru
      _
    %p73 = scmp.eq.s32.totalorder 0, 0
    // Predicated region
    $region34: #{tpu_custom_call.1} parent=1 // pred_check
      %p74 = pneg %p73
    $region35: #{tpu_custom_call.1} parent=1 // pred_check_branch
      %76 = sbr.rel (%p74) target = $region37
    $region36: #{tpu_custom_call.1} parent=1 // pred_region
      %v77 = vld [vmem:[#allocation4] sm:$0xff]
      %v78 = vld [vmem:[#allocation4 + $0x8] sm:$0xff]
      %v79 = vld [vmem:[#allocation9] sm:$0xff]
      %v80 = vld [vmem:[#allocation9 + $0x8] sm:$0xff]
      %v81 = vld [vmem:[#allocation9 + $0x10] sm:$0xff]
      %v82 = vld [vmem:[#allocation9 + $0x18] sm:$0xff]
      %vm83 = vcmask 261120
      %v85 = vsel %vm83, %v77, 0
      %v88 = vsel %vm83, %v78, 0
      %90 = vmatprep.subr.mxu0 0.0
      %91 = vmatpush1.msra.mxu0 0.0
      %92 = vmatprep.subr.mxu0 0.0
      %93 = vmatpush1.msra.mxu0 0.0
      %94 = vmatprep.subr.mxu0 0.0
      %95 = vmatpush1.msra.mxu0 0.0
      %96 = vmatprep.subr.mxu0 0.0
      %97 = vmatpush1.msra.mxu0 0.0
      %98 = vmatprep.subr.mxu0 0.0
      %99 = vmatpush1.msra.mxu0 0.0
      %100 = vmatprep.subr.mxu0 0.0
      %101 = vmatpush1.msra.mxu0 0.0
      %102 = vmatprep.subr.mxu0 0.0
      %103 = vmatpush1.msra.mxu0 0.0
      %104 = vmatprep.subr.mxu0 0.0
      %105 = vmatpush1.msra.mxu0 0.0
      %106 = vmatprep.subr.mxu0 0.0
      %107 = vmatpush1.msra.mxu0 0.0
      %108 = vmatprep.subr.mxu0 0.0
      %109 = vmatpush1.msra.mxu0 0.0
      %110 = vmatprep.subr.mxu0 0.0
      %111 = vmatpush1.msra.mxu0 0.0
      %112 = vmatprep.subr.mxu0 0.0
      %113 = vmatpush1.msra.mxu0 0.0
      %114 = vmatprep.subr.mxu0 0.0
      %115 = vmatpush1.msra.mxu0 %v82
      %116 = vmatprep.subr.mxu0 0.0
      %117 = vmatpush1.msra.mxu0 %v81
      %118 = vmatprep.subr.mxu0 0.0
      %119 = vmatpush1.msra.mxu0 %v80
      %120 = vmatprep.subr.mxu0 0.0
      %121 = vmatpush1.msra.mxu0 %v79
      %122 = vmatprep.subr.mxu0 0.0
      %123 = vmatpush2.msra.mxu0 0.0
      %124 = vmatprep.subr.mxu0 0.0
      %125 = vmatpush2.msra.mxu0 0.0
      %126 = vmatprep.subr.mxu0 0.0
      %127 = vmatpush2.msra.mxu0 0.0
      %128 = vmatprep.subr.mxu0 0.0
      %129 = vmatpush2.msra.mxu0 0.0
      %130 = vmatprep.subr.mxu0 0.0
      %131 = vmatpush2.msra.mxu0 0.0
      %132 = vmatprep.subr.mxu0 0.0
      %133 = vmatpush2.msra.mxu0 0.0
      %134 = vmatprep.subr.mxu0 0.0
      %135 = vmatpush2.msra.mxu0 0.0
      %136 = vmatprep.subr.mxu0 0.0
      %137 = vmatpush2.msra.mxu0 0.0
      %138 = vmatprep.subr.mxu0 0.0
      %139 = vmatpush2.msra.mxu0 0.0
      %140 = vmatprep.subr.mxu0 0.0
      %141 = vmatpush2.msra.mxu0 0.0
      %142 = vmatprep.subr.mxu0 0.0
      %143 = vmatpush2.msra.mxu0 0.0
      %144 = vmatprep.subr.mxu0 0.0
      %145 = vmatpush2.msra.mxu0 0.0
      %146 = vmatprep.subr.mxu0 0.0
      %147 = vmatpush2.msra.mxu0 0.0
      %148 = vmatprep.subr.mxu0 0.0
      %149 = vmatpush2.msra.mxu0 0.0
      %150 = vmatprep.subr.mxu0 0.0
      %151 = vmatpush2.msra.mxu0 0.0
      %152 = vmatprep.subr.mxu0 0.0
      %153 = vmatpush2.msra.mxu0 0.0
      %154 = vmatprep.mubr.f32.mxu0 0.0
      %155 = vmatmul.mubr.f32.gmra.mxu0 %v85
      %v156 = vpop.f32.mrf.mxu0
      %v157 = vadd.f32 0.0, %v156
      %v158 = vpop.f32.mrf.mxu0
      %159 = vmatprep.mubr.f32.mxu0 0.0
      %160 = vmatmul.mubr.f32.gmra.mxu0 %v88
      %v161 = vpop.f32.mrf.mxu0
      %v162 = vadd.f32 0.0, %v161
      %v163 = vpop.f32.mrf.mxu0
      %164 = vdwg.mxu0
      %165 = vst [vmem:[#allocation2] sm:$0xff] %v157
      %166 = vst [vmem:[#allocation2 + $0x8] sm:$0xff] %v162
      %167 = vst [vmem:[#allocation3] sm:$0xff] 0.0
      %168 = vst [vmem:[#allocation3 + $0x8] sm:$0xff] 0.0
    $region37: #{tpu_custom_call.1} parent=1 // pred_fallthru
      _
    %v169 = vld [vmem:[#allocation7] sm:$0xff]
    %v170 = vld [vmem:[#allocation7 + $0x8] sm:$0xff]
    %v171 = vld [vmem:[#allocation10] sm:$0xff]
    %v172 = vld [vmem:[#allocation10 + $0x8] sm:$0xff]
    %v173 = vld [vmem:[#allocation10 + $0x10] sm:$0xff]
    %v174 = vld [vmem:[#allocation10 + $0x18] sm:$0xff]
    %v175 = vld [vmem:[#allocation10 + $0x20] sm:$0xff]
    %v176 = vld [vmem:[#allocation10 + $0x28] sm:$0xff]
    %v177 = vld [vmem:[#allocation10 + $0x30] sm:$0xff]
    %v178 = vld [vmem:[#allocation10 + $0x38] sm:$0xff]
    %vm179 = vcmask 261120
    %v181 = vsel %vm179, %v169, 0
    %v184 = vsel %vm179, %v170, 0
    %186 = vmatprep.subr.mxu0 0.0
    %187 = vmatpush1.msra.mxu0 0.0
    %188 = vmatprep.subr.mxu0 0.0
    %189 = vmatpush1.msra.mxu0 0.0
    %190 = vmatprep.subr.mxu0 0.0
    %191 = vmatpush1.msra.mxu0 0.0
    %192 = vmatprep.subr.mxu0 0.0
    %193 = vmatpush1.msra.mxu0 0.0
    %194 = vmatprep.subr.mxu0 0.0
    %195 = vmatpush1.msra.mxu0 0.0
    %196 = vmatprep.subr.mxu0 0.0
    %197 = vmatpush1.msra.mxu0 0.0
    %198 = vmatprep.subr.mxu0 0.0
    %199 = vmatpush1.msra.mxu0 0.0
    %200 = vmatprep.subr.mxu0 0.0
    %201 = vmatpush1.msra.mxu0 0.0
    %202 = vmatprep.subr.mxu0 0.0
    %203 = vmatpush1.msra.mxu0 0.0
    %204 = vmatprep.subr.mxu0 0.0
    %205 = vmatpush1.msra.mxu0 0.0
    %206 = vmatprep.subr.mxu0 0.0
    %207 = vmatpush1.msra.mxu0 0.0
    %208 = vmatprep.subr.mxu0 0.0
    %209 = vmatpush1.msra.mxu0 0.0
    %210 = vmatprep.subr.mxu0 %v178
    %211 = vmatpush1.msra.mxu0 %v177
    %212 = vmatprep.subr.mxu0 %v176
    %213 = vmatpush1.msra.mxu0 %v175
    %214 = vmatprep.subr.mxu0 %v174
    %215 = vmatpush1.msra.mxu0 %v173
    %216 = vmatprep.subr.mxu0 %v172
    %217 = vmatpush1.msra.mxu0 %v171
    %218 = vmatprep.subr.mxu0 0.0
    %219 = vmatpush2.msra.mxu0 0.0
    %220 = vmatprep.subr.mxu0 0.0
    %221 = vmatpush2.msra.mxu0 0.0
    %222 = vmatprep.subr.mxu0 0.0
    %223 = vmatpush2.msra.mxu0 0.0
    %224 = vmatprep.subr.mxu0 0.0
    %225 = vmatpush2.msra.mxu0 0.0
    %226 = vmatprep.subr.mxu0 0.0
    %227 = vmatpush2.msra.mxu0 0.0
    %228 = vmatprep.subr.mxu0 0.0
    %229 = vmatpush2.msra.mxu0 0.0
    %230 = vmatprep.subr.mxu0 0.0
    %231 = vmatpush2.msra.mxu0 0.0
    %232 = vmatprep.subr.mxu0 0.0
    %233 = vmatpush2.msra.mxu0 0.0
    %234 = vmatprep.subr.mxu0 0.0
    %235 = vmatpush2.msra.mxu0 0.0
    %236 = vmatprep.subr.mxu0 0.0
    %237 = vmatpush2.msra.mxu0 0.0
    %238 = vmatprep.subr.mxu0 0.0
    %239 = vmatpush2.msra.mxu0 0.0
    %240 = vmatprep.subr.mxu0 0.0
    %241 = vmatpush2.msra.mxu0 0.0
    %242 = vmatprep.subr.mxu0 0.0
    %243 = vmatpush2.msra.mxu0 0.0
    %244 = vmatprep.subr.mxu0 0.0
    %245 = vmatpush2.msra.mxu0 0.0
    %246 = vmatprep.subr.mxu0 0.0
    %247 = vmatpush2.msra.mxu0 0.0
    %248 = vmatprep.subr.mxu0 0.0
    %249 = vmatpush2.msra.mxu0 0.0
    %250 = vmatprep.mubr.f32.mxu0 0.0
    %251 = vmatmul.mubr.f32.gmra.mxu0 %v181
    %v252 = vpop.f32.mrf.mxu0
    %v253 = vadd.f32 0.0, %v252
    %v254 = vpop.f32.mrf.mxu0
    %v255 = vadd.f32 0.0, %v254
    %256 = vmatprep.mubr.f32.mxu0 0.0
    %257 = vmatmul.mubr.f32.gmra.mxu0 %v184
    %v258 = vpop.f32.mrf.mxu0
    %v259 = vadd.f32 0.0, %v258
    %v260 = vpop.f32.mrf.mxu0
    %v261 = vadd.f32 0.0, %v260
    %262 = vdwg.mxu0
    %v263 = vld [vmem:[#allocation2] sm:$0xff]
    %v264 = vld [vmem:[#allocation2 + $0x8] sm:$0xff]
    %265 = vmatprep.subr.mxu0 0.0
    %266 = vmatpush1.xpose.msra.mxu0 0.0
    %267 = vmatprep.subr.mxu0 0.0
    %268 = vmatpush1.xpose.msra.mxu0 0.0
    %269 = vmatprep.subr.mxu0 0.0
    %270 = vmatpush1.xpose.msra.mxu0 0.0
    %271 = vmatprep.subr.mxu0 0.0
    %272 = vmatpush1.xpose.msra.mxu0 0.0
    %273 = vmatprep.subr.mxu0 0.0
    %274 = vmatpush1.xpose.msra.mxu0 0.0
    %275 = vmatprep.subr.mxu0 0.0
    %276 = vmatpush1.xpose.msra.mxu0 0.0
    %277 = vmatprep.subr.mxu0 0.0
    %278 = vmatpush1.xpose.msra.mxu0 0.0
    %279 = vmatprep.subr.mxu0 0.0
    %280 = vmatpush1.xpose.msra.mxu0 0.0
    %281 = vmatprep.subr.mxu0 0.0
    %282 = vmatpush1.xpose.msra.mxu0 0.0
    %283 = vmatprep.subr.mxu0 0.0
    %284 = vmatpush1.xpose.msra.mxu0 0.0
    %285 = vmatprep.subr.mxu0 0.0
    %286 = vmatpush1.xpose.msra.mxu0 0.0
    %287 = vmatprep.subr.mxu0 0.0
    %288 = vmatpush1.xpose.msra.mxu0 0.0
    %289 = vmatprep.subr.mxu0 0.0
    %290 = vmatpush1.xpose.msra.mxu0 0.0
    %291 = vmatprep.subr.mxu0 0.0
    %292 = vmatpush1.xpose.msra.mxu0 0.0
    %293 = vmatprep.subr.mxu0 0.0
    %294 = vmatpush1.xpose.msra.mxu0 0.0
    %295 = vmatprep.subr.mxu0 0.0
    %296 = vmatpush1.xpose.msra.mxu0 %v253
    %297 = vmatprep.subr.mxu0 0.0
    %298 = vmatpush2.xpose.msra.mxu0 0.0
    %299 = vmatprep.subr.mxu0 0.0
    %300 = vmatpush2.xpose.msra.mxu0 0.0
    %301 = vmatprep.subr.mxu0 0.0
    %302 = vmatpush2.xpose.msra.mxu0 0.0
    %303 = vmatprep.subr.mxu0 0.0
    %304 = vmatpush2.xpose.msra.mxu0 0.0
    %305 = vmatprep.subr.mxu0 0.0
    %306 = vmatpush2.xpose.msra.mxu0 0.0
    %307 = vmatprep.subr.mxu0 0.0
    %308 = vmatpush2.xpose.msra.mxu0 0.0
    %309 = vmatprep.subr.mxu0 0.0
    %310 = vmatpush2.xpose.msra.mxu0 0.0
    %311 = vmatprep.subr.mxu0 0.0
    %312 = vmatpush2.xpose.msra.mxu0 0.0
    %313 = vmatprep.subr.mxu0 0.0
    %314 = vmatpush2.xpose.msra.mxu0 0.0
    %315 = vmatprep.subr.mxu0 0.0
    %316 = vmatpush2.xpose.msra.mxu0 0.0
    %317 = vmatprep.subr.mxu0 0.0
    %318 = vmatpush2.xpose.msra.mxu0 0.0
    %319 = vmatprep.subr.mxu0 0.0
    %320 = vmatpush2.xpose.msra.mxu0 0.0
    %321 = vmatprep.subr.mxu0 0.0
    %322 = vmatpush2.xpose.msra.mxu0 0.0
    %323 = vmatprep.subr.mxu0 0.0
    %324 = vmatpush2.xpose.msra.mxu0 0.0
    %325 = vmatprep.subr.mxu0 0.0
    %326 = vmatpush2.xpose.msra.mxu0 0.0
    %327 = vmatprep.subr.mxu0 0.0
    %328 = vmatpush2.xpose.msra.mxu0 0.0
    %329 = vmatprep.mubr.f32.mxu0 0.0
    %330 = vmatmul.mubr.f32.gmra.mxu0 %v263
    %v331 = vpop.f32.mrf.mxu0
    %v332 = vadd.f32 0.0, %v331
    %v333 = vpop.f32.mrf.mxu0
    %334 = vdwg.mxu0
    %335 = vmatprep.subr.mxu0 0.0
    %336 = vmatpush1.xpose.msra.mxu0 0.0
    %337 = vmatprep.subr.mxu0 0.0
    %338 = vmatpush1.xpose.msra.mxu0 0.0
    %339 = vmatprep.subr.mxu0 0.0
    %340 = vmatpush1.xpose.msra.mxu0 0.0
    %341 = vmatprep.subr.mxu0 0.0
    %342 = vmatpush1.xpose.msra.mxu0 0.0
    %343 = vmatprep.subr.mxu0 0.0
    %344 = vmatpush1.xpose.msra.mxu0 0.0
    %345 = vmatprep.subr.mxu0 0.0
    %346 = vmatpush1.xpose.msra.mxu0 0.0
    %347 = vmatprep.subr.mxu0 0.0
    %348 = vmatpush1.xpose.msra.mxu0 0.0
    %349 = vmatprep.subr.mxu0 0.0
    %350 = vmatpush1.xpose.msra.mxu0 0.0
    %351 = vmatprep.subr.mxu0 0.0
    %352 = vmatpush1.xpose.msra.mxu0 0.0
    %353 = vmatprep.subr.mxu0 0.0
    %354 = vmatpush1.xpose.msra.mxu0 0.0
    %355 = vmatprep.subr.mxu0 0.0
    %356 = vmatpush1.xpose.msra.mxu0 0.0
    %357 = vmatprep.subr.mxu0 0.0
    %358 = vmatpush1.xpose.msra.mxu0 0.0
    %359 = vmatprep.subr.mxu0 0.0
    %360 = vmatpush1.xpose.msra.mxu0 0.0
    %361 = vmatprep.subr.mxu0 0.0
    %362 = vmatpush1.xpose.msra.mxu0 0.0
    %363 = vmatprep.subr.mxu0 0.0
    %364 = vmatpush1.xpose.msra.mxu0 0.0
    %365 = vmatprep.subr.mxu0 0.0
    %366 = vmatpush1.xpose.msra.mxu0 %v259
    %367 = vmatprep.subr.mxu0 0.0
    %368 = vmatpush2.xpose.msra.mxu0 0.0
    %369 = vmatprep.subr.mxu0 0.0
    %370 = vmatpush2.xpose.msra.mxu0 0.0
    %371 = vmatprep.subr.mxu0 0.0
    %372 = vmatpush2.xpose.msra.mxu0 0.0
    %373 = vmatprep.subr.mxu0 0.0
    %374 = vmatpush2.xpose.msra.mxu0 0.0
    %375 = vmatprep.subr.mxu0 0.0
    %376 = vmatpush2.xpose.msra.mxu0 0.0
    %377 = vmatprep.subr.mxu0 0.0
    %378 = vmatpush2.xpose.msra.mxu0 0.0
    %379 = vmatprep.subr.mxu0 0.0
    %380 = vmatpush2.xpose.msra.mxu0 0.0
    %381 = vmatprep.subr.mxu0 0.0
    %382 = vmatpush2.xpose.msra.mxu0 0.0
    %383 = vmatprep.subr.mxu0 0.0
    %384 = vmatpush2.xpose.msra.mxu0 0.0
    %385 = vmatprep.subr.mxu0 0.0
    %386 = vmatpush2.xpose.msra.mxu0 0.0
    %387 = vmatprep.subr.mxu0 0.0
    %388 = vmatpush2.xpose.msra.mxu0 0.0
    %389 = vmatprep.subr.mxu0 0.0
    %390 = vmatpush2.xpose.msra.mxu0 0.0
    %391 = vmatprep.subr.mxu0 0.0
    %392 = vmatpush2.xpose.msra.mxu0 0.0
    %393 = vmatprep.subr.mxu0 0.0
    %394 = vmatpush2.xpose.msra.mxu0 0.0
    %395 = vmatprep.subr.mxu0 0.0
    %396 = vmatpush2.xpose.msra.mxu0 0.0
    %397 = vmatprep.subr.mxu0 0.0
    %398 = vmatpush2.xpose.msra.mxu0 0.0
    %399 = vmatprep.mubr.f32.mxu0 0.0
    %400 = vmatmul.mubr.f32.gmra.mxu0 %v264
    %v401 = vpop.f32.mrf.mxu0
    %v402 = vadd.f32 0.0, %v401
    %v403 = vpop.f32.mrf.mxu0
    %404 = vdwg.mxu0
    %v405 = vmul.f32 %v332, 0.25
    %v406 = vmul.f32 %v402, 0.25
    %vm407 = vcmask 64512
    %v408 = vsel %vm407, %v405, -inf
    %v409 = vsel %vm407, %v406, -inf
    %v410 = vmax.f32 %v408, %v409
    %v411 = vsub.f32 %v405, %v410
    %v412 = vsub.f32 %v406, %v410
    %v413 = vmul.f32 %v411, 1.442695
    %v414 = vpow.pop %v413
    %v415 = vmul.f32 %v412, 1.442695
    %v416 = vpow.pop %v415
    %v417 = vsel %vm407, %v414, 0.0
    %v418 = vsel %vm407, %v416, 0.0
    %v419 = vadd.f32 %v417, %v418
    %v420 = vrcp.pop %v419
    %v421 = vmul.f32 1.0, %v420
    %v422 = vmul.f32 %v414, %v421
    %v423 = vmul.f32 %v416, %v421
    %v424 = vld [vmem:[#allocation3] sm:$0xff]
    %v425 = vld [vmem:[#allocation3 + $0x8] sm:$0xff]
    %v427 = vsel %vm407, %v422, 0
    %429 = vmatprep.subr.mxu0 0.0
    %430 = vmatpush1.msra.mxu0 0.0
    %431 = vmatprep.subr.mxu0 0.0
    %432 = vmatpush1.msra.mxu0 0.0
    %433 = vmatprep.subr.mxu0 0.0
    %434 = vmatpush1.msra.mxu0 0.0
    %435 = vmatprep.subr.mxu0 0.0
    %436 = vmatpush1.msra.mxu0 0.0
    %437 = vmatprep.subr.mxu0 0.0
    %438 = vmatpush1.msra.mxu0 0.0
    %439 = vmatprep.subr.mxu0 0.0
    %440 = vmatpush1.msra.mxu0 0.0
    %441 = vmatprep.subr.mxu0 0.0
    %442 = vmatpush1.msra.mxu0 0.0
    %443 = vmatprep.subr.mxu0 0.0
    %444 = vmatpush1.msra.mxu0 0.0
    %445 = vmatprep.subr.mxu0 0.0
    %446 = vmatpush1.msra.mxu0 0.0
    %447 = vmatprep.subr.mxu0 0.0
    %448 = vmatpush1.msra.mxu0 0.0
    %449 = vmatprep.subr.mxu0 0.0
    %450 = vmatpush1.msra.mxu0 0.0
    %451 = vmatprep.subr.mxu0 0.0
    %452 = vmatpush1.msra.mxu0 0.0
    %453 = vmatprep.subr.mxu0 0.0
    %454 = vmatpush1.msra.mxu0 0.0
    %455 = vmatprep.subr.mxu0 0.0
    %456 = vmatpush1.msra.mxu0 0.0
    %457 = vmatprep.subr.mxu0 0.0
    %458 = vmatpush1.msra.mxu0 0.0
    %459 = vmatprep.subr.mxu0 0.0
    %460 = vmatpush1.msra.mxu0 %v255
    %461 = vmatprep.subr.mxu0 0.0
    %462 = vmatpush2.msra.mxu0 0.0
    %463 = vmatprep.subr.mxu0 0.0
    %464 = vmatpush2.msra.mxu0 0.0
    %465 = vmatprep.subr.mxu0 0.0
    %466 = vmatpush2.msra.mxu0 0.0
    %467 = vmatprep.subr.mxu0 0.0
    %468 = vmatpush2.msra.mxu0 0.0
    %469 = vmatprep.subr.mxu0 0.0
    %470 = vmatpush2.msra.mxu0 0.0
    %471 = vmatprep.subr.mxu0 0.0
    %472 = vmatpush2.msra.mxu0 0.0
    %473 = vmatprep.subr.mxu0 0.0
    %474 = vmatpush2.msra.mxu0 0.0
    %475 = vmatprep.subr.mxu0 0.0
    %476 = vmatpush2.msra.mxu0 0.0
    %477 = vmatprep.subr.mxu0 0.0
    %478 = vmatpush2.msra.mxu0 0.0
    %479 = vmatprep.subr.mxu0 0.0
    %480 = vmatpush2.msra.mxu0 0.0
    %481 = vmatprep.subr.mxu0 0.0
    %482 = vmatpush2.msra.mxu0 0.0
    %483 = vmatprep.subr.mxu0 0.0
    %484 = vmatpush2.msra.mxu0 0.0
    %485 = vmatprep.subr.mxu0 0.0
    %486 = vmatpush2.msra.mxu0 0.0
    %487 = vmatprep.subr.mxu0 0.0
    %488 = vmatpush2.msra.mxu0 0.0
    %489 = vmatprep.subr.mxu0 0.0
    %490 = vmatpush2.msra.mxu0 0.0
    %491 = vmatprep.subr.mxu0 0.0
    %492 = vmatpush2.msra.mxu0 0.0
    %493 = vmatprep.mubr.f32.mxu0 0.0
    %494 = vmatmul.mubr.f32.gmra.mxu0 %v427
    %v495 = vpop.f32.mrf.mxu0
    %v496 = vadd.f32 0.0, %v495
    %v497 = vpop.f32.mrf.mxu0
    %498 = vdwg.mxu0
    %v500 = vsel %vm407, %v423, 0
    %502 = vmatprep.subr.mxu0 0.0
    %503 = vmatpush1.msra.mxu0 0.0
    %504 = vmatprep.subr.mxu0 0.0
    %505 = vmatpush1.msra.mxu0 0.0
    %506 = vmatprep.subr.mxu0 0.0
    %507 = vmatpush1.msra.mxu0 0.0
    %508 = vmatprep.subr.mxu0 0.0
    %509 = vmatpush1.msra.mxu0 0.0
    %510 = vmatprep.subr.mxu0 0.0
    %511 = vmatpush1.msra.mxu0 0.0
    %512 = vmatprep.subr.mxu0 0.0
    %513 = vmatpush1.msra.mxu0 0.0
    %514 = vmatprep.subr.mxu0 0.0
    %515 = vmatpush1.msra.mxu0 0.0
    %516 = vmatprep.subr.mxu0 0.0
    %517 = vmatpush1.msra.mxu0 0.0
    %518 = vmatprep.subr.mxu0 0.0
    %519 = vmatpush1.msra.mxu0 0.0
    %520 = vmatprep.subr.mxu0 0.0
    %521 = vmatpush1.msra.mxu0 0.0
    %522 = vmatprep.subr.mxu0 0.0
    %523 = vmatpush1.msra.mxu0 0.0
    %524 = vmatprep.subr.mxu0 0.0
    %525 = vmatpush1.msra.mxu0 0.0
    %526 = vmatprep.subr.mxu0 0.0
    %527 = vmatpush1.msra.mxu0 0.0
    %528 = vmatprep.subr.mxu0 0.0
    %529 = vmatpush1.msra.mxu0 0.0
    %530 = vmatprep.subr.mxu0 0.0
    %531 = vmatpush1.msra.mxu0 0.0
    %532 = vmatprep.subr.mxu0 0.0
    %533 = vmatpush1.msra.mxu0 %v261
    %534 = vmatprep.subr.mxu0 0.0
    %535 = vmatpush2.msra.mxu0 0.0
    %536 = vmatprep.subr.mxu0 0.0
    %537 = vmatpush2.msra.mxu0 0.0
    %538 = vmatprep.subr.mxu0 0.0
    %539 = vmatpush2.msra.mxu0 0.0
    %540 = vmatprep.subr.mxu0 0.0
    %541 = vmatpush2.msra.mxu0 0.0
    %542 = vmatprep.subr.mxu0 0.0
    %543 = vmatpush2.msra.mxu0 0.0
    %544 = vmatprep.subr.mxu0 0.0
    %545 = vmatpush2.msra.mxu0 0.0
    %546 = vmatprep.subr.mxu0 0.0
    %547 = vmatpush2.msra.mxu0 0.0
    %548 = vmatprep.subr.mxu0 0.0
    %549 = vmatpush2.msra.mxu0 0.0
    %550 = vmatprep.subr.mxu0 0.0
    %551 = vmatpush2.msra.mxu0 0.0
    %552 = vmatprep.subr.mxu0 0.0
    %553 = vmatpush2.msra.mxu0 0.0
    %554 = vmatprep.subr.mxu0 0.0
    %555 = vmatpush2.msra.mxu0 0.0
    %556 = vmatprep.subr.mxu0 0.0
    %557 = vmatpush2.msra.mxu0 0.0
    %558 = vmatprep.subr.mxu0 0.0
    %559 = vmatpush2.msra.mxu0 0.0
    %560 = vmatprep.subr.mxu0 0.0
    %561 = vmatpush2.msra.mxu0 0.0
    %562 = vmatprep.subr.mxu0 0.0
    %563 = vmatpush2.msra.mxu0 0.0
    %564 = vmatprep.subr.mxu0 0.0
    %565 = vmatpush2.msra.mxu0 0.0
    %566 = vmatprep.mubr.f32.mxu0 0.0
    %567 = vmatmul.mubr.f32.gmra.mxu0 %v500
    %v568 = vpop.f32.mrf.mxu0
    %v569 = vadd.f32 0.0, %v568
    %v570 = vpop.f32.mrf.mxu0
    %571 = vdwg.mxu0
    %v572 = vadd.f32 %v424, %v496
    %v573 = vadd.f32 %v425, %v569
    %574 = vst [vmem:[#allocation3] sm:$0xff] %v572
    %575 = vst [vmem:[#allocation3 + $0x8] sm:$0xff] %v573
    // Predicated region
    $region38: #{tpu_custom_call.1} parent=1 // pred_check
      %p576 = pneg %p73
    $region39: #{tpu_custom_call.1} parent=1 // pred_check_branch
      %578 = sbr.rel (%p576) target = $region41
    $region40: #{tpu_custom_call.1} parent=1 // pred_region
      %v579 = vld [vmem:[#allocation3] sm:$0xff]
      %v580 = vld [vmem:[#allocation3 + $0x8] sm:$0xff]
      %581 = vst [vmem:[#allocation12] sm:$0xff] %v579
      %582 = vst [vmem:[#allocation12 + $0x8] sm:$0xff] %v580
    $region41: #{tpu_custom_call.1} parent=1 // pred_fallthru
      _
    // Predicated region
    $region42: #{tpu_custom_call.1} parent=1 // pred_check
      _
    $region43: #{tpu_custom_call.1} parent=1 // pred_check_branch
      %584 = sbr.rel (0) target = $region45
    $region44: #{tpu_custom_call.1} parent=1 // pred_region
      %s586 = ssub.s32 256, 256
      %587 = vsyncadd [#allocation6], %s586
      %s588 = sshll.u32 [#allocation12], 4
      %s589 = int_to_ptr.vmem [resolvable:$true] %s588
      %594 = dma.vmem_to_hbm [thread:$0]  %s589, 256, %s4, [#allocation6], 128, 128, 8
    $region45: #{tpu_custom_call.1} parent=1 // pred_fallthru
      _
    // Predicated region
    $region46: #{tpu_custom_call.1} parent=1 // pred_check
      _
    $region47: #{tpu_custom_call.1} parent=1 // pred_check_branch
      %596 = sbr.rel (0) target = $region49
    $region48: #{tpu_custom_call.1} parent=1 // pred_region
      %597 = dma.done [#allocation6], 256
    $region49: #{tpu_custom_call.1} parent=1 // pred_fallthru
      _
    %598 = vsyncpa [#allocation5], 1
    %599 = vsyncpa [#allocation8], 1
    %600 = vsyncpa [#allocation11], 1
    %601 = vsyncpa [#allocation6], 1

</llo_original>
